<compile_context>
chip_gen: v6e
topology: v6e:2x2x1
jax: 0.10.0
libtpu: 0.0.40
codegen_flags: <defaults>
</compile_context>

<pallas_src>
import functools
import math

import jax
import jax.numpy as jnp
from jax import lax
from jax.experimental import pallas as pl
from jax.experimental.pallas import tpu as pltpu


def vit_self_attention_kernel(x_ref, wqkv_ref, bqkv_ref, o_ref, *,
                              num_heads, head_dim):
    # x_ref:    (bb, S, H)  activation block
    # wqkv_ref: (3H, H)     packed [Wq; Wk; Wv], PyTorch (out, in) layout, bf16
    # bqkv_ref: (1, 3H)     packed [bq, bk, bv], f32
    # o_ref:    (bb, S, H)  output block
    bb, S, H = x_ref.shape
    hd = head_dim
    scale = 1.0 / math.sqrt(float(hd))

    # contract dim 1 of both operands == x @ W^T (no wrapper-side transpose)
    dn_t = (((1,), (1,)), ((), ()))   # a @ b^T
    dn_n = (((1,), (0,)), ((), ()))   # a @ b

    # ---- fused QKV projection: one MXU pass over bb*S rows and 3H columns ----
    x2 = x_ref[...].reshape(bb * S, H).astype(jnp.bfloat16)
    qkv = lax.dot_general(x2, wqkv_ref[...], dn_t,
                          preferred_element_type=jnp.float32) + bqkv_ref[...]

    q = qkv[:, 0 * H:1 * H] * scale        # fold 1/sqrt(hd) into q once
    k = qkv[:, 1 * H:2 * H]
    v = qkv[:, 2 * H:3 * H]

    # ---- attention per (batch element in block, head) ----
    # Fully unrolled: fine for small bb * num_heads and small S.
    # TODO(synk): for large S / many heads, switch to lax.fori_loop over heads
    # (single live (S,S) scratch) or a flash-style key-block loop.
    for b in range(bb):
        rows = slice(b * S, (b + 1) * S)
        for h in range(num_heads):
            cols = slice(h * hd, (h + 1) * hd)
            q_h = q[rows, cols].astype(jnp.bfloat16)     # (S, hd)
            k_h = k[rows, cols].astype(jnp.bfloat16)     # (S, hd)
            v_h = v[rows, cols].astype(jnp.bfloat16)     # (S, hd)

            # scores (scale already folded into q) + stable softmax numerator
            s = lax.dot_general(q_h, k_h, dn_t,
                                preferred_element_type=jnp.float32)  # (S, S)
            m = jnp.max(s, axis=-1, keepdims=True)
            e = jnp.exp(s - m)                                       # f32
            l = jnp.sum(e, axis=-1, keepdims=True)                   # (S, 1)

            # normalize the (S, hd) output instead of the (S, S) probs;
            # reciprocal goes to the (otherwise idle) EUP slot.
            o_h = lax.dot_general(e.astype(jnp.bfloat16), v_h, dn_n,
                                  preferred_element_type=jnp.float32)
            o_h = o_h * pl.reciprocal(l, approx=True)

            # TODO(synk): attention-probability dropout omitted (eval-mode /
            # p=0 identity semantics); not a training-parity implementation.
            o_ref[b, :, cols] = o_h.astype(o_ref.dtype)   # direct store, no concat


def vit_self_attention(x, wq, bq, wk, bk, wv, bv, num_heads, *,
                       batch_block=None):
    """x: (B, S, H); w*: (H, H) PyTorch (out, in); b*: (H,). Returns (B, S, H)."""
    B, S, H = x.shape
    assert H % num_heads == 0
    head_dim = H // num_heads

    if batch_block is None:
        # Keep >=2 grid steps when B >= 2 (feed both v7x TensorCores), but use
        # as few / as big steps as possible (per-step overhead ~0.35 us).
        n_steps = 1
        if B >= 2:
            n_steps = 2
            while B % n_steps:
                n_steps += 1
        batch_block = B // n_steps
    assert B % batch_block == 0
    n_blocks = B // batch_block

    # Pack [Wq; Wk; Wv] -> (3H, H) bf16 (one resident VMEM block, one MXU
    # matmul) and biases -> (1, 3H) f32 (added after f32 accumulation).
    wqkv = jnp.concatenate([wq, wk, wv], axis=0).astype(jnp.bfloat16)
    bqkv = jnp.concatenate([bq, bk, bv]).reshape(1, 3 * H).astype(jnp.float32)

    kernel = functools.partial(vit_self_attention_kernel,
                               num_heads=num_heads, head_dim=head_dim)

    act_spec = pl.BlockSpec((batch_block, S, H), lambda i: (i, 0, 0))
    w_spec = pl.BlockSpec((3 * H, H), lambda i: (0, 0))    # VMEM-resident
    b_spec = pl.BlockSpec((1, 3 * H), lambda i: (0, 0))    # VMEM-resident
    out_spec = pl.BlockSpec((batch_block, S, H), lambda i: (i, 0, 0))

    # Raise the scoped-VMEM limit only when production sizes demand it (v5e's
    # default is 16 MiB); never request beyond v7x's 64 MiB physical VMEM.
    itemsize = jnp.dtype(x.dtype).itemsize
    est = (2 * 2 * batch_block * S * H * itemsize            # x + out, double-buffered
           + 2 * (wqkv.size * 2 + bqkv.size * 4)             # resident weights/bias
           + 8 * batch_block * S * 3 * H * 4                 # qkv + per-head temps
           + 8 * S * S * 4)                                  # scores / exp
    params = dict(dimension_semantics=("parallel",))
    if est > (16 * 1024 * 1024):
        params["vmem_limit_bytes"] = min(int(est), 64 * 1024 * 1024)

    return pl.pallas_call(
        kernel,
        out_shape=jax.ShapeDtypeStruct((B, S, H), x.dtype),
        grid=(n_blocks,),
        in_specs=[act_spec, w_spec, b_spec],
        out_specs=out_spec,
        compiler_params=pltpu.CompilerParams(**params),
    )(x, wqkv, bqkv)


def _reference(x, wq, bq, wk, bk, wv, bv, num_heads):
    """Plain-JAX f32 mirror of the PyTorch forward (return_score=False path)."""
    B, S, H = x.shape
    hd = H // num_heads
    q = x @ wq.T + bq
    k = x @ wk.T + bk
    v = x @ wv.T + bv

    def split(t):
        return t.reshape(B, S, num_heads, hd).transpose(0, 2, 1, 3)

    qh, kh, vh = split(q), split(k), split(v)
    scores = jnp.einsum("bhqd,bhkd->bhqk", qh, kh) / (float(hd) ** 0.5)
    probs = jax.nn.softmax(scores, axis=-1)
    out = jnp.einsum("bhqk,bhkd->bhqd", probs, vh)
    return out.transpose(0, 2, 1, 3).reshape(B, S, H)


if __name__ == "__main__":
    key = jax.random.PRNGKey(0)
    k_x, k_wq, k_bq, k_wk, k_bk, k_wv, k_bv = jax.random.split(key, 7)

    # config: hidden_dims=32, num_attn_heads=4, dropout=0.0 (eval)
    B, S, H, NH = 2, 8, 32, 4

    x = jax.random.normal(k_x, (B, S, H), dtype=jnp.float32)
    bound = 1.0 / (H ** 0.5)   # mimics nn.Linear's uniform init
    wq = jax.random.uniform(k_wq, (H, H), jnp.float32, -bound, bound)
    bq = jax.random.uniform(k_bq, (H,), jnp.float32, -bound, bound)
    wk = jax.random.uniform(k_wk, (H, H), jnp.float32, -bound, bound)
    bk = jax.random.uniform(k_bk, (H,), jnp.float32, -bound, bound)
    wv = jax.random.uniform(k_wv, (H, H), jnp.float32, -bound, bound)
    bv = jax.random.uniform(k_bv, (H,), jnp.float32, -bound, bound)

    out = vit_self_attention(x, wq, bq, wk, bk, wv, bv, NH)
    out = jax.block_until_ready(out)

    ref = _reference(x, wq, bq, wk, bk, wv, bv, NH)
    assert out.shape == (B, S, H)
    # bf16 MXU operands (f32 accumulation / f32 softmax stats) -> loosen
    # the tolerance vs. the pure-f32 reference.
    assert jnp.allclose(out, ref, atol=5e-2, rtol=5e-2), float(
        jnp.max(jnp.abs(out - ref)))

    print("KERNEL_OK")
</pallas_src>

<mosaic_0001>
module attributes {stable_mosaic.version = 11 : i64} {
  func.func @vit_self_attention_kernel(%arg0: i32, %arg1: memref<1x8x32xf32, #tpu.memory_space<vmem>>, %arg2: memref<96x32xbf16, #tpu.memory_space<vmem>>, %arg3: memref<1x96xf32, #tpu.memory_space<vmem>>, %arg4: memref<1x8x32xf32, #tpu.memory_space<vmem>>) attributes {dimension_semantics = [#tpu.dimension_semantics<parallel>], iteration_bounds = array<i64: 2>, scalar_prefetch = 0 : i64, scratch_operands = 0 : i64, tpu.core_type = #tpu.core_type<tc>, window_params = [{transform_indices = @transform_0, window_bounds = array<i64: 1, 8, 32>}, {pipeline_mode = #tpu.pipeline_mode<synchronous>, transform_indices = @transform_1, window_bounds = array<i64: 96, 32>}, {pipeline_mode = #tpu.pipeline_mode<synchronous>, transform_indices = @transform_2, window_bounds = array<i64: 1, 96>}, {transform_indices = @transform_3, window_bounds = array<i64: 1, 8, 32>}]} {
    %c0 = arith.constant 0 : index
    %c0_0 = arith.constant 0 : index
    %c0_1 = arith.constant 0 : index
    %0 = vector.load %arg1[%c0, %c0_0, %c0_1] : memref<1x8x32xf32, #tpu.memory_space<vmem>>, vector<1x8x32xf32>
    %1 = vector.shape_cast %0 : vector<1x8x32xf32> to vector<8x32xf32>
    %2 = arith.truncf %1 : vector<8x32xf32> to vector<8x32xbf16>
    %c0_2 = arith.constant 0 : index
    %c0_3 = arith.constant 0 : index
    %3 = vector.load %arg2[%c0_2, %c0_3] : memref<96x32xbf16, #tpu.memory_space<vmem>>, vector<96x32xbf16>
    %cst = arith.constant dense<0.000000e+00> : vector<8x96xf32>
    %4 = tpu.matmul %2, %3, %cst {dimension_numbers = #tpu.dot_dimension_numbers<[1], [1], [0], [0], [0, 0, 1, 0], [], []>} : vector<8x32xbf16>, vector<96x32xbf16>, vector<8x96xf32> -> vector<8x96xf32>
    %c0_4 = arith.constant 0 : index
    %c0_5 = arith.constant 0 : index
    %5 = vector.load %arg3[%c0_4, %c0_5] : memref<1x96xf32, #tpu.memory_space<vmem>>, vector<1x96xf32>
    %6 = vector.broadcast %5 : vector<1x96xf32> to vector<8x96xf32>
    %7 = arith.addf %4, %6 : vector<8x96xf32>
    %8 = vector.extract_strided_slice %7 {offsets = [0, 0], sizes = [8, 32], strides = [1, 1]} : vector<8x96xf32> to vector<8x32xf32>
    %cst_6 = arith.constant 0.353553385 : f32
    %9 = vector.broadcast %cst_6 : f32 to vector<8x32xf32>
    %10 = arith.mulf %8, %9 : vector<8x32xf32>
    %11 = vector.extract_strided_slice %7 {offsets = [0, 32], sizes = [8, 32], strides = [1, 1]} : vector<8x96xf32> to vector<8x32xf32>
    %12 = vector.extract_strided_slice %7 {offsets = [0, 64], sizes = [8, 32], strides = [1, 1]} : vector<8x96xf32> to vector<8x32xf32>
    %13 = vector.extract_strided_slice %10 {offsets = [0, 0], sizes = [8, 8], strides = [1, 1]} : vector<8x32xf32> to vector<8x8xf32>
    %14 = arith.truncf %13 : vector<8x8xf32> to vector<8x8xbf16>
    %15 = vector.extract_strided_slice %11 {offsets = [0, 0], sizes = [8, 8], strides = [1, 1]} : vector<8x32xf32> to vector<8x8xf32>
    %16 = arith.truncf %15 : vector<8x8xf32> to vector<8x8xbf16>
    %17 = vector.extract_strided_slice %12 {offsets = [0, 0], sizes = [8, 8], strides = [1, 1]} : vector<8x32xf32> to vector<8x8xf32>
    %18 = arith.truncf %17 : vector<8x8xf32> to vector<8x8xbf16>
    %cst_7 = arith.constant dense<0.000000e+00> : vector<8x8xf32>
    %19 = tpu.matmul %14, %16, %cst_7 {dimension_numbers = #tpu.dot_dimension_numbers<[1], [1], [0], [0], [0, 0, 1, 0], [], []>} : vector<8x8xbf16>, vector<8x8xbf16>, vector<8x8xf32> -> vector<8x8xf32>
    %cst_8 = arith.constant dense<0xFF800000> : vector<8xf32>
    %20 = vector.multi_reduction <maximumf>, %19, %cst_8 [1] : vector<8x8xf32> to vector<8xf32>
    %21 = vector.shape_cast %20 : vector<8xf32> to vector<8x1xf32>
    %22 = vector.broadcast %21 : vector<8x1xf32> to vector<8x8xf32>
    %23 = arith.subf %19, %22 : vector<8x8xf32>
    %24 = math.exp %23 : vector<8x8xf32>
    %cst_9 = arith.constant dense<0.000000e+00> : vector<8xf32>
    %25 = vector.multi_reduction <add>, %24, %cst_9 [1] : vector<8x8xf32> to vector<8xf32>
    %26 = vector.shape_cast %25 : vector<8xf32> to vector<8x1xf32>
    %27 = arith.truncf %24 : vector<8x8xf32> to vector<8x8xbf16>
    %cst_10 = arith.constant dense<0.000000e+00> : vector<8x8xf32>
    %28 = tpu.matmul %27, %18, %cst_10 {dimension_numbers = #tpu.dot_dimension_numbers<[1], [0], [0], [1], [0, 0, 1, 1], [], []>} : vector<8x8xbf16>, vector<8x8xbf16>, vector<8x8xf32> -> vector<8x8xf32>
    %29 = tpu.reciprocal %26 {approx = true} : vector<8x1xf32> -> vector<8x1xf32>
    %30 = vector.broadcast %29 : vector<8x1xf32> to vector<8x8xf32>
    %31 = arith.mulf %28, %30 : vector<8x8xf32>
    %c0_11 = arith.constant 0 : index
    %c0_12 = arith.constant 0 : index
    %c0_13 = arith.constant 0 : index
    %32 = vector.load %arg4[%c0_11, %c0_12, %c0_13] : memref<1x8x32xf32, #tpu.memory_space<vmem>>, vector<1x8x8xf32>
    %33 = vector.shape_cast %32 : vector<1x8x8xf32> to vector<8x8xf32>
    %34 = vector.shape_cast %31 : vector<8x8xf32> to vector<1x8x8xf32>
    tpu.vector_store %arg4[%c0_11, %c0_12, %c0_13], %34 {strides = array<i32>} : memref<1x8x32xf32, #tpu.memory_space<vmem>>, vector<1x8x8xf32>,
    %35 = vector.extract_strided_slice %10 {offsets = [0, 8], sizes = [8, 8], strides = [1, 1]} : vector<8x32xf32> to vector<8x8xf32>
    %36 = arith.truncf %35 : vector<8x8xf32> to vector<8x8xbf16>
    %37 = vector.extract_strided_slice %11 {offsets = [0, 8], sizes = [8, 8], strides = [1, 1]} : vector<8x32xf32> to vector<8x8xf32>
    %38 = arith.truncf %37 : vector<8x8xf32> to vector<8x8xbf16>
    %39 = vector.extract_strided_slice %12 {offsets = [0, 8], sizes = [8, 8], strides = [1, 1]} : vector<8x32xf32> to vector<8x8xf32>
    %40 = arith.truncf %39 : vector<8x8xf32> to vector<8x8xbf16>
    %cst_14 = arith.constant dense<0.000000e+00> : vector<8x8xf32>
    %41 = tpu.matmul %36, %38, %cst_14 {dimension_numbers = #tpu.dot_dimension_numbers<[1], [1], [0], [0], [0, 0, 1, 0], [], []>} : vector<8x8xbf16>, vector<8x8xbf16>, vector<8x8xf32> -> vector<8x8xf32>
    %cst_15 = arith.constant dense<0xFF800000> : vector<8xf32>
    %42 = vector.multi_reduction <maximumf>, %41, %cst_15 [1] : vector<8x8xf32> to vector<8xf32>
    %43 = vector.shape_cast %42 : vector<8xf32> to vector<8x1xf32>
    %44 = vector.broadcast %43 : vector<8x1xf32> to vector<8x8xf32>
    %45 = arith.subf %41, %44 : vector<8x8xf32>
    %46 = math.exp %45 : vector<8x8xf32>
    %cst_16 = arith.constant dense<0.000000e+00> : vector<8xf32>
    %47 = vector.multi_reduction <add>, %46, %cst_16 [1] : vector<8x8xf32> to vector<8xf32>
    %48 = vector.shape_cast %47 : vector<8xf32> to vector<8x1xf32>
    %49 = arith.truncf %46 : vector<8x8xf32> to vector<8x8xbf16>
    %cst_17 = arith.constant dense<0.000000e+00> : vector<8x8xf32>
    %50 = tpu.matmul %49, %40, %cst_17 {dimension_numbers = #tpu.dot_dimension_numbers<[1], [0], [0], [1], [0, 0, 1, 1], [], []>} : vector<8x8xbf16>, vector<8x8xbf16>, vector<8x8xf32> -> vector<8x8xf32>
    %51 = tpu.reciprocal %48 {approx = true} : vector<8x1xf32> -> vector<8x1xf32>
    %52 = vector.broadcast %51 : vector<8x1xf32> to vector<8x8xf32>
    %53 = arith.mulf %50, %52 : vector<8x8xf32>
    %c0_18 = arith.constant 0 : index
    %c0_19 = arith.constant 0 : index
    %c8 = arith.constant 8 : index
    %54 = vector.load %arg4[%c0_18, %c0_19, %c8] : memref<1x8x32xf32, #tpu.memory_space<vmem>>, vector<1x8x8xf32>
    %55 = vector.shape_cast %54 : vector<1x8x8xf32> to vector<8x8xf32>
    %56 = vector.shape_cast %53 : vector<8x8xf32> to vector<1x8x8xf32>
    tpu.vector_store %arg4[%c0_18, %c0_19, %c8], %56 {strides = array<i32>} : memref<1x8x32xf32, #tpu.memory_space<vmem>>, vector<1x8x8xf32>,
    %57 = vector.extract_strided_slice %10 {offsets = [0, 16], sizes = [8, 8], strides = [1, 1]} : vector<8x32xf32> to vector<8x8xf32>
    %58 = arith.truncf %57 : vector<8x8xf32> to vector<8x8xbf16>
    %59 = vector.extract_strided_slice %11 {offsets = [0, 16], sizes = [8, 8], strides = [1, 1]} : vector<8x32xf32> to vector<8x8xf32>
    %60 = arith.truncf %59 : vector<8x8xf32> to vector<8x8xbf16>
    %61 = vector.extract_strided_slice %12 {offsets = [0, 16], sizes = [8, 8], strides = [1, 1]} : vector<8x32xf32> to vector<8x8xf32>
    %62 = arith.truncf %61 : vector<8x8xf32> to vector<8x8xbf16>
    %cst_20 = arith.constant dense<0.000000e+00> : vector<8x8xf32>
    %63 = tpu.matmul %58, %60, %cst_20 {dimension_numbers = #tpu.dot_dimension_numbers<[1], [1], [0], [0], [0, 0, 1, 0], [], []>} : vector<8x8xbf16>, vector<8x8xbf16>, vector<8x8xf32> -> vector<8x8xf32>
    %cst_21 = arith.constant dense<0xFF800000> : vector<8xf32>
    %64 = vector.multi_reduction <maximumf>, %63, %cst_21 [1] : vector<8x8xf32> to vector<8xf32>
    %65 = vector.shape_cast %64 : vector<8xf32> to vector<8x1xf32>
    %66 = vector.broadcast %65 : vector<8x1xf32> to vector<8x8xf32>
    %67 = arith.subf %63, %66 : vector<8x8xf32>
    %68 = math.exp %67 : vector<8x8xf32>
    %cst_22 = arith.constant dense<0.000000e+00> : vector<8xf32>
    %69 = vector.multi_reduction <add>, %68, %cst_22 [1] : vector<8x8xf32> to vector<8xf32>
    %70 = vector.shape_cast %69 : vector<8xf32> to vector<8x1xf32>
    %71 = arith.truncf %68 : vector<8x8xf32> to vector<8x8xbf16>
    %cst_23 = arith.constant dense<0.000000e+00> : vector<8x8xf32>
    %72 = tpu.matmul %71, %62, %cst_23 {dimension_numbers = #tpu.dot_dimension_numbers<[1], [0], [0], [1], [0, 0, 1, 1], [], []>} : vector<8x8xbf16>, vector<8x8xbf16>, vector<8x8xf32> -> vector<8x8xf32>
    %73 = tpu.reciprocal %70 {approx = true} : vector<8x1xf32> -> vector<8x1xf32>
    %74 = vector.broadcast %73 : vector<8x1xf32> to vector<8x8xf32>
    %75 = arith.mulf %72, %74 : vector<8x8xf32>
    %c0_24 = arith.constant 0 : index
    %c0_25 = arith.constant 0 : index
    %c16 = arith.constant 16 : index
    %76 = vector.load %arg4[%c0_24, %c0_25, %c16] : memref<1x8x32xf32, #tpu.memory_space<vmem>>, vector<1x8x8xf32>
    %77 = vector.shape_cast %76 : vector<1x8x8xf32> to vector<8x8xf32>
    %78 = vector.shape_cast %75 : vector<8x8xf32> to vector<1x8x8xf32>
    tpu.vector_store %arg4[%c0_24, %c0_25, %c16], %78 {strides = array<i32>} : memref<1x8x32xf32, #tpu.memory_space<vmem>>, vector<1x8x8xf32>,
    %79 = vector.extract_strided_slice %10 {offsets = [0, 24], sizes = [8, 8], strides = [1, 1]} : vector<8x32xf32> to vector<8x8xf32>
    %80 = arith.truncf %79 : vector<8x8xf32> to vector<8x8xbf16>
    %81 = vector.extract_strided_slice %11 {offsets = [0, 24], sizes = [8, 8], strides = [1, 1]} : vector<8x32xf32> to vector<8x8xf32>
    %82 = arith.truncf %81 : vector<8x8xf32> to vector<8x8xbf16>
    %83 = vector.extract_strided_slice %12 {offsets = [0, 24], sizes = [8, 8], strides = [1, 1]} : vector<8x32xf32> to vector<8x8xf32>
    %84 = arith.truncf %83 : vector<8x8xf32> to vector<8x8xbf16>
    %cst_26 = arith.constant dense<0.000000e+00> : vector<8x8xf32>
    %85 = tpu.matmul %80, %82, %cst_26 {dimension_numbers = #tpu.dot_dimension_numbers<[1], [1], [0], [0], [0, 0, 1, 0], [], []>} : vector<8x8xbf16>, vector<8x8xbf16>, vector<8x8xf32> -> vector<8x8xf32>
    %cst_27 = arith.constant dense<0xFF800000> : vector<8xf32>
    %86 = vector.multi_reduction <maximumf>, %85, %cst_27 [1] : vector<8x8xf32> to vector<8xf32>
    %87 = vector.shape_cast %86 : vector<8xf32> to vector<8x1xf32>
    %88 = vector.broadcast %87 : vector<8x1xf32> to vector<8x8xf32>
    %89 = arith.subf %85, %88 : vector<8x8xf32>
    %90 = math.exp %89 : vector<8x8xf32>
    %cst_28 = arith.constant dense<0.000000e+00> : vector<8xf32>
    %91 = vector.multi_reduction <add>, %90, %cst_28 [1] : vector<8x8xf32> to vector<8xf32>
    %92 = vector.shape_cast %91 : vector<8xf32> to vector<8x1xf32>
    %93 = arith.truncf %90 : vector<8x8xf32> to vector<8x8xbf16>
    %cst_29 = arith.constant dense<0.000000e+00> : vector<8x8xf32>
    %94 = tpu.matmul %93, %84, %cst_29 {dimension_numbers = #tpu.dot_dimension_numbers<[1], [0], [0], [1], [0, 0, 1, 1], [], []>} : vector<8x8xbf16>, vector<8x8xbf16>, vector<8x8xf32> -> vector<8x8xf32>
    %95 = tpu.reciprocal %92 {approx = true} : vector<8x1xf32> -> vector<8x1xf32>
    %96 = vector.broadcast %95 : vector<8x1xf32> to vector<8x8xf32>
    %97 = arith.mulf %94, %96 : vector<8x8xf32>
    %c0_30 = arith.constant 0 : index
    %c0_31 = arith.constant 0 : index
    %c24 = arith.constant 24 : index
    %98 = vector.load %arg4[%c0_30, %c0_31, %c24] : memref<1x8x32xf32, #tpu.memory_space<vmem>>, vector<1x8x8xf32>
    %99 = vector.shape_cast %98 : vector<1x8x8xf32> to vector<8x8xf32>
    %100 = vector.shape_cast %97 : vector<8x8xf32> to vector<1x8x8xf32>
    tpu.vector_store %arg4[%c0_30, %c0_31, %c24], %100 {strides = array<i32>} : memref<1x8x32xf32, #tpu.memory_space<vmem>>, vector<1x8x8xf32>,
    return
  }
  func.func @transform_0(%arg0: i32) -> (i32, i32, i32) {
    %c0_i32 = arith.constant 0 : i32
    %c0_i32_0 = arith.constant 0 : i32
    %c0_i32_1 = arith.constant 0 : i32
    return %arg0, %c0_i32, %c0_i32_0 : i32, i32, i32
  }
  func.func @transform_1(%arg0: i32) -> (i32, i32) {
    %c0_i32 = arith.constant 0 : i32
    %c0_i32_0 = arith.constant 0 : i32
    %c0_i32_1 = arith.constant 0 : i32
    return %c0_i32, %c0_i32_0 : i32, i32
  }
  func.func @transform_2(%arg0: i32) -> (i32, i32) {
    %c0_i32 = arith.constant 0 : i32
    %c0_i32_0 = arith.constant 0 : i32
    %c0_i32_1 = arith.constant 0 : i32
    return %c0_i32, %c0_i32_0 : i32, i32
  }
  func.func @transform_3(%arg0: i32) -> (i32, i32, i32) {
    %c0_i32 = arith.constant 0 : i32
    %c0_i32_0 = arith.constant 0 : i32
    %c0_i32_1 = arith.constant 0 : i32
    return %arg0, %c0_i32, %c0_i32_0 : i32, i32, i32
  }
}

</mosaic_0001>

<llo_original>
// kernel: tpu_custom_call.1
$region0: #{tpu_custom_call.1}
  #allocation0 [shape = 'u32[]', space=smem, size = 0x4, offset = 0x4, fixed_abs, tag = 'smem constant byte address 0x4 - core index']
  #allocation1 [shape = 'u32[144,128]{1,0:T(1,128)}', space=vmem, size = 0x12000, scoped, tag = 'internal scratch']
  %s0 = inlined_call_operand.vmem [shape: f32[2,8,32], index: 0, kind: input, shape index: {}]
  %s1 = inlined_call_operand.vmem [shape: bf16[96,32], index: 1, kind: input, shape index: {}]
  %s2 = inlined_call_operand.vmem [shape: f32[1,96], index: 2, kind: input, shape index: {}]
  %s3 = inlined_call_operand.hbm [shape: f32[2,8,32], index: 3, kind: output, shape index: {}]
  %s4 = sld [smem:[#allocation0]]
  $region45: #{tpu_custom_call.1} parent=0
    _
  %s6 = ssub.s32 1, %s4
  %s7 = scalar_select 0, %s6, %s4
  $region1: #{tpu_custom_call.1} parent=0
    #allocation2 [shape = 'u8[8192]{0}', space=vmem, size = 0x2000, scoped, tag = 'output window, operand 0']
    #allocation3 [shape = 's32[2]{0}', space=sflag, size = 0x8, scoped, tag = 'scoped memory for tpu_custom_call.1']
    %8 = vsyncpa [#allocation3], 0
    %s9 = scalar_lea.sflag [#allocation3], 1
    %10 = vsyncpa %s9, 0
    loop: start=0, step=1, limit=4
    $region2: #{tpu_custom_call.1} parent=1 // loop_pre_header
      _
    $region3: #{tpu_custom_call.1} parent=1 // loop_header
      %s12 = sphi 0, %s16
      %p13 = scmp.ge.s32.totalorder %s12, 4
      %s22 = sphi 0, %s24
      %s25 = sphi 0, %s22
      %s26 = sphi 0, %s25
      %s42 = sphi 0, %s26
      %s46 = sphi 0, %s46
      %s48 = sphi 0, %s46
      %s49 = sphi 0, %s48
      %s63 = sphi 0, %s49
      %s67 = sphi 0, %s67
      %s69 = sphi 0, %s67
      %s70 = sphi 0, %s69
      %s84 = sphi 0, %s70
      %s90 = sphi 0, %s92
      %s93 = sphi 0, %s90
      %s94 = sphi 0, %s93
      %s110 = sphi 0, %s94
    $region4: #{tpu_custom_call.1} parent=1 // loop_header_branch
      %15 = sbr.rel (%p13) target = $region8
    $region5: #{tpu_custom_call.1} parent=1 // loop_body
      %s17 = ssub.s32 %s12, 1
      %s18 = ssub.s32 %s12, 2
      %s19 = sadd.s32 %s12, 1
      %s20 = ssub.s32 %s12, %s19
      %p21 = scmp.eq.s32.totalorder %s20, 0
      %s23 = sadd.s32 %s22, 1
      %s24 = scalar_select %p21, %s22, %s23
      %p27 = pneg %p21
      %p28 = scmp.eq.s32.totalorder %s12, 1
      %p29 = por %p27, %p28
      %p30 = scmp.ne.s32.totalorder %s22, %s25
      %p31 = scmp.eq.s32.totalorder %s12, 0
      %p32 = por %p30, %p31
      %p33 = scmp.ne.s32.totalorder %s22, %s25
      %p34 = scmp.eq.s32.totalorder %s17, 1
      %p35 = por %p33, %p34
      %p36 = scmp.ne.s32.totalorder %s25, %s26
      %p37 = scmp.eq.s32.totalorder %s17, 0
      %p38 = por %p36, %p37
      %p39 = scmp.ne.s32.totalorder %s25, %s26
      %p40 = scmp.eq.s32.totalorder %s18, 1
      %p41 = por %p39, %p40
      %p43 = scmp.ne.s32.totalorder %s26, %s42
      %p44 = scmp.eq.s32.totalorder %s18, 0
      %p45 = por %p43, %p44
      %s47 = sadd.s32 %s46, 1
      %p50 = scmp.eq.s32.totalorder %s12, 1
      %p51 = scmp.ne.s32.totalorder %s46, %s48
      %p52 = scmp.eq.s32.totalorder %s12, 0
      %p53 = por %p51, %p52
      %p54 = scmp.ne.s32.totalorder %s46, %s48
      %p55 = scmp.eq.s32.totalorder %s17, 1
      %p56 = por %p54, %p55
      %p57 = scmp.ne.s32.totalorder %s48, %s49
      %p58 = scmp.eq.s32.totalorder %s17, 0
      %p59 = por %p57, %p58
      %p60 = scmp.ne.s32.totalorder %s48, %s49
      %p61 = scmp.eq.s32.totalorder %s18, 1
      %p62 = por %p60, %p61
      %p64 = scmp.ne.s32.totalorder %s49, %s63
      %p65 = scmp.eq.s32.totalorder %s18, 0
      %p66 = por %p64, %p65
      %s68 = sadd.s32 %s67, 1
      %p71 = scmp.eq.s32.totalorder %s12, 1
      %p72 = scmp.ne.s32.totalorder %s67, %s69
      %p73 = scmp.eq.s32.totalorder %s12, 0
      %p74 = por %p72, %p73
      %p75 = scmp.ne.s32.totalorder %s67, %s69
      %p76 = scmp.eq.s32.totalorder %s17, 1
      %p77 = por %p75, %p76
      %p78 = scmp.ne.s32.totalorder %s69, %s70
      %p79 = scmp.eq.s32.totalorder %s17, 0
      %p80 = por %p78, %p79
      %p81 = scmp.ne.s32.totalorder %s69, %s70
      %p82 = scmp.eq.s32.totalorder %s18, 1
      %p83 = por %p81, %p82
      %p85 = scmp.ne.s32.totalorder %s70, %s84
      %p86 = scmp.eq.s32.totalorder %s18, 0
      %p87 = por %p85, %p86
      %s88 = ssub.s32 %s12, %s19
      %p89 = scmp.eq.s32.totalorder %s88, 0
      %s91 = sadd.s32 %s90, 1
      %s92 = scalar_select %p89, %s90, %s91
      %p95 = pneg %p89
      %p96 = scmp.eq.s32.totalorder %s12, 1
      %p97 = por %p95, %p96
      %p98 = scmp.ne.s32.totalorder %s90, %s93
      %p99 = scmp.eq.s32.totalorder %s12, 0
      %p100 = por %p98, %p99
      %p101 = scmp.ne.s32.totalorder %s90, %s93
      %p102 = scmp.eq.s32.totalorder %s17, 1
      %p103 = por %p101, %p102
      %p104 = scmp.ne.s32.totalorder %s93, %s94
      %p105 = scmp.eq.s32.totalorder %s17, 0
      %p106 = por %p104, %p105
      %p107 = scmp.ne.s32.totalorder %s93, %s94
      %p108 = scmp.eq.s32.totalorder %s18, 1
      %p109 = por %p107, %p108
      %p111 = scmp.ne.s32.totalorder %s94, %s110
      %p112 = scmp.eq.s32.totalorder %s18, 0
      %p113 = por %p111, %p112
      %p114 = scmp.le.s32.totalorder 1, %s12
      %p115 = scmp.lt.s32.totalorder %s12, 3
      %p116 = pnand %p114, %p115
      %p117 = pneg %p116
      // Predicated region
      $region9: #{tpu_custom_call.1} parent=5 // pred_check
        _
      $region10: #{tpu_custom_call.1} parent=5 // pred_check_branch
        %119 = sbr.rel (%p116) target = $region12
      $region11: #{tpu_custom_call.1} parent=5 // pred_region
        %s120 = ssub.s32 %s12, 1
        // Predicated region
        $region13: #{tpu_custom_call.1} parent=11 // pred_check
          %p121 = pneg %p59
        $region14: #{tpu_custom_call.1} parent=11 // pred_check_branch
          %123 = sbr.rel (%p121) target = $region16
        $region15: #{tpu_custom_call.1} parent=11 // pred_region
          _
        $region16: #{tpu_custom_call.1} parent=11 // pred_fallthru
          _
        // Predicated region
        $region17: #{tpu_custom_call.1} parent=11 // pred_check
          %p124 = pneg %p80
        $region18: #{tpu_custom_call.1} parent=11 // pred_check_branch
          %126 = sbr.rel (%p124) target = $region20
        $region19: #{tpu_custom_call.1} parent=11 // pred_region
          _
        $region20: #{tpu_custom_call.1} parent=11 // pred_fallthru
          _
      $region12: #{tpu_custom_call.1} parent=5 // pred_fallthru
        _
      %p127 = scmp.lt.s32.totalorder %s12, 2
      // Predicated region
      $region21: #{tpu_custom_call.1} parent=5 // pred_check
        %p128 = pneg %p127
      $region22: #{tpu_custom_call.1} parent=5 // pred_check_branch
        %130 = sbr.rel (%p128) target = $region24
      $region23: #{tpu_custom_call.1} parent=5 // pred_region
        // Predicated region
        $region25: #{tpu_custom_call.1} parent=23 // pred_check
          %p131 = pneg %p32
        $region26: #{tpu_custom_call.1} parent=23 // pred_check_branch
          %133 = sbr.rel (%p131) target = $region28
        $region27: #{tpu_custom_call.1} parent=23 // pred_region
          %p134 = scmp.lt.s32.totalorder %s12, 1
          %s135 = scalar_select %p134, %s12, 1
          %s136 = smul.addr %s135, 8
          %s137 = scalar_lea.vmem %s0, %s136
        $region28: #{tpu_custom_call.1} parent=23 // pred_fallthru
          _
      $region24: #{tpu_custom_call.1} parent=5 // pred_fallthru
        _
      %p138 = scmp.le.s32.totalorder 1, %s12
      %p139 = scmp.lt.s32.totalorder %s12, 3
      %p140 = pnand %p138, %p139
      %p141 = pneg %p140
      // Predicated region
      $region29: #{tpu_custom_call.1} parent=5 // pred_check
        _
      $region30: #{tpu_custom_call.1} parent=5 // pred_check_branch
        %143 = sbr.rel (%p140) target = $region32
      $region31: #{tpu_custom_call.1} parent=5 // pred_region
        %s144 = ssub.s32 %s12, 1
        %p145 = scmp.lt.s32.totalorder %s17, 1
        %s146 = scalar_select %p145, %s17, 1
        %s147 = smul.addr %s146, 8
        %s148 = scalar_lea.vmem %s0, %s147
        %p149 = pneg %p38
        %p150 = pneg %p35
        %p151 = pneg %p59
        %p152 = pneg %p56
        %p153 = pneg %p80
        %p154 = pneg %p77
        %p155 = pneg %p106
        %p156 = pneg %p103
        %s157 = sand.u32 %s93, 1
        %s158 = scalar_lea.sflag [#allocation3], %s157
        %s159 = sand.u32 %s93, 1
        %s160 = smul.addr %s159, 8
        %s161 = scalar_lea.vmem [#allocation2], %s160
        %p162 = scmp.lt.s32.totalorder %s17, 1
        %s163 = scalar_select %p162, %s17, 1
        %s164 = smul.addr %s163, 8
        %s165 = scalar_lea.vmem %s0, %s164
        %v167 = vld [vmem:[%s165] sm:$0xff]
        %v168 = vpack.c.bf16 %v167, %v167
        %v169 = vld [vmem:[%s1] sm:$0xf]
        %v170 = vld [vmem:[%s1 + $0x4] sm:$0xf]
        %v171 = vld [vmem:[%s1 + $0x8] sm:$0xf]
        %v172 = vld [vmem:[%s1 + $0xc] sm:$0xf]
        %v173 = vld [vmem:[%s1 + $0x10] sm:$0xf]
        %v174 = vld [vmem:[%s1 + $0x14] sm:$0xf]
        %v175 = vld [vmem:[%s1 + $0x18] sm:$0xf]
        %v176 = vld [vmem:[%s1 + $0x1c] sm:$0xf]
        %v177 = vld [vmem:[%s1 + $0x20] sm:$0xf]
        %v178 = vld [vmem:[%s1 + $0x24] sm:$0xf]
        %v179 = vld [vmem:[%s1 + $0x28] sm:$0xf]
        %v180 = vld [vmem:[%s1 + $0x2c] sm:$0xf]
        %v181 = vld [vmem:[%s2] sm:$0x1]
        %v183 = vlaneseq
        %v184 = vshrl.u32 %v183, 7
        %v185 = vsub.s32 0, %v184
        %v186 = vrot.slane %v181, %v185
        %v200 = vunpack.c.l.b16 %v169
        %v201 = vunpack.c.l.b16 %v170
        %v202 = vunpack.c.l.b16 %v171
        %v203 = vunpack.c.l.b16 %v172
        %v204 = vunpack.c.l.b16 %v173
        %v205 = vunpack.c.l.b16 %v174
        %v206 = vunpack.c.l.b16 %v175
        %v207 = vunpack.c.l.b16 %v176
        %v208 = vunpack.c.l.b16 %v177
        %v209 = vunpack.c.l.b16 %v178
        %v210 = vunpack.c.l.b16 %v179
        %v211 = vunpack.c.l.b16 %v180
        %v212 = vpack.c.b16 %v201, %v200
        %v213 = vpack.c.b16 %v203, %v202
        %v214 = vpack.c.b16 %v205, %v204
        %v215 = vpack.c.b16 %v207, %v206
        %v216 = vpack.c.b16 %v209, %v208
        %v217 = vpack.c.b16 %v211, %v210
        %vm218 = vcmask 261120
        %v220 = vsel %vm218, %v168, 0
        %v223 = vsel %vm218, %v212, 0
        %v226 = vsel %vm218, %v213, 0
        %v229 = vsel %vm218, %v214, 0
        %v232 = vsel %vm218, %v215, 0
        %v235 = vsel %vm218, %v216, 0
        %v238 = vsel %vm218, %v217, 0
        %240 = vmatprep.subr.bf16.mxu0 0
        %241 = vmatpush1.bf16.xpose.msra.mxu0 0
        %242 = vmatprep.subr.bf16.mxu0 0
        %243 = vmatpush1.bf16.xpose.msra.mxu0 0
        %244 = vmatprep.subr.bf16.mxu0 0
        %245 = vmatpush1.bf16.xpose.msra.mxu0 %v238
        %246 = vmatprep.subr.bf16.mxu0 0
        %247 = vmatpush1.bf16.xpose.msra.mxu0 %v235
        %248 = vmatprep.subr.bf16.mxu0 0
        %249 = vmatpush1.bf16.xpose.msra.mxu0 %v232
        %250 = vmatprep.subr.bf16.mxu0 0
        %251 = vmatpush1.bf16.xpose.msra.mxu0 %v229
        %252 = vmatprep.subr.bf16.mxu0 0
        %253 = vmatpush1.bf16.xpose.msra.mxu0 %v226
        %254 = vmatprep.subr.bf16.mxu0 0
        %255 = vmatpush1.bf16.xpose.msra.mxu0 %v223
        %256 = vmatprep.subr.bf16.mxu0 0
        %257 = vmatpush2.bf16.xpose.msra.mxu0 0
        %258 = vmatprep.subr.bf16.mxu0 0
        %259 = vmatpush2.bf16.xpose.msra.mxu0 0
        %260 = vmatprep.subr.bf16.mxu0 0
        %261 = vmatpush2.bf16.xpose.msra.mxu0 0
        %262 = vmatprep.subr.bf16.mxu0 0
        %263 = vmatpush2.bf16.xpose.msra.mxu0 0
        %264 = vmatprep.subr.bf16.mxu0 0
        %265 = vmatpush2.bf16.xpose.msra.mxu0 0
        %266 = vmatprep.subr.bf16.mxu0 0
        %267 = vmatpush2.bf16.xpose.msra.mxu0 0
        %268 = vmatprep.subr.bf16.mxu0 0
        %269 = vmatpush2.bf16.xpose.msra.mxu0 0
        %270 = vmatprep.subr.bf16.mxu0 0
        %271 = vmatpush2.bf16.xpose.msra.mxu0 0
        %272 = vmatprep.mubr.bf16.mxu0 0
        %273 = vmatmul.mubr.bf16.gmra.mxu0 %v220
        %v274 = vpop.f32.mrf.mxu0
        %v275 = vadd.f32 %v186, %v274
        %v276 = vpop.f32.mrf.mxu0
        %v277 = vpop.f32.mrf.mxu0
        %v278 = vpop.f32.mrf.mxu0
        %279 = vdwg.mxu0
        %v280 = vmul.f32 %v275, 0.35355338
        %v281 = vpack.c.bf16 %v280, %v280
        %v282 = vpack.c.bf16 %v275, %v275
        %284 = vrot.lane.b32.xlu0 %v282, 96
        %v285 = vpop.permute.xlu0 %284
        %vm286 = vcmask 64512
        %v288 = vsel %vm286, %v281, 0
        %v291 = vsel %vm286, %v285, 0
        %293 = vmatprep.subr.bf16.mxu0 0
        %294 = vmatpush1.bf16.xpose.msra.mxu0 0
        %295 = vmatprep.subr.bf16.mxu0 0
        %296 = vmatpush1.bf16.xpose.msra.mxu0 0
        %297 = vmatprep.subr.bf16.mxu0 0
        %298 = vmatpush1.bf16.xpose.msra.mxu0 0
        %299 = vmatprep.subr.bf16.mxu0 0
        %300 = vmatpush1.bf16.xpose.msra.mxu0 0
        %301 = vmatprep.subr.bf16.mxu0 0
        %302 = vmatpush1.bf16.xpose.msra.mxu0 0
        %303 = vmatprep.subr.bf16.mxu0 0
        %304 = vmatpush1.bf16.xpose.msra.mxu0 0
        %305 = vmatprep.subr.bf16.mxu0 0
        %306 = vmatpush1.bf16.xpose.msra.mxu0 0
        %307 = vmatprep.subr.bf16.mxu0 0
        %308 = vmatpush1.bf16.xpose.msra.mxu0 %v291
        %309 = vmatprep.subr.bf16.mxu0 0
        %310 = vmatpush2.bf16.xpose.msra.mxu0 0
        %311 = vmatprep.subr.bf16.mxu0 0
        %312 = vmatpush2.bf16.xpose.msra.mxu0 0
        %313 = vmatprep.subr.bf16.mxu0 0
        %314 = vmatpush2.bf16.xpose.msra.mxu0 0
        %315 = vmatprep.subr.bf16.mxu0 0
        %316 = vmatpush2.bf16.xpose.msra.mxu0 0
        %317 = vmatprep.subr.bf16.mxu0 0
        %318 = vmatpush2.bf16.xpose.msra.mxu0 0
        %319 = vmatprep.subr.bf16.mxu0 0
        %320 = vmatpush2.bf16.xpose.msra.mxu0 0
        %321 = vmatprep.subr.bf16.mxu0 0
        %322 = vmatpush2.bf16.xpose.msra.mxu0 0
        %323 = vmatprep.subr.bf16.mxu0 0
        %324 = vmatpush2.bf16.xpose.msra.mxu0 0
        %325 = vmatprep.mubr.bf16.mxu0 0
        %326 = vmatmul.mubr.bf16.gmra.mxu0 %v288
        %v327 = vpop.f32.mrf.mxu0
        %v328 = vadd.f32 0.0, %v327
        %v329 = vpop.f32.mrf.mxu0
        %v330 = vpop.f32.mrf.mxu0
        %v331 = vpop.f32.mrf.mxu0
        %332 = vdwg.mxu0
        %v333 = vsel %vm286, %v328, -inf
        %334 = vmax.xlane.f32.xlu0 %v333
        %v335 = vpop.xlane.xlu0 %334
        %v336 = vsub.f32 %v328, %v335
        %v337 = vmul.f32 %v336, 1.442695
        %v338 = vpow.pop %v337
        %v339 = vsel %vm286, %v338, 0.0
        %340 = vadd.xlane.f32.xlu0 %v339
        %v341 = vpop.xlane.xlu0 %340
        %v342 = vpack.c.bf16 %v338, %v338
        %343 = vrot.lane.b32.xlu0 %v282, 64
        %v344 = vpop.permute.xlu0 %343
        %v346 = vsel %vm286, %v342, 0
        %vm348 = vcmask 1043456
        %v350 = vsel %vm348, %v344, 0
        %352 = vmatprep.subr.bf16.mxu0 0
        %353 = vmatpush1.bf16.msra.mxu0 0
        %354 = vmatprep.subr.bf16.mxu0 0
        %355 = vmatpush1.bf16.msra.mxu0 0
        %356 = vmatprep.subr.bf16.mxu0 0
        %357 = vmatpush1.bf16.msra.mxu0 0
        %358 = vmatprep.subr.bf16.mxu0 0
        %359 = vmatpush1.bf16.msra.mxu0 0
        %360 = vmatprep.subr.bf16.mxu0 0
        %361 = vmatpush1.bf16.msra.mxu0 0
        %362 = vmatprep.subr.bf16.mxu0 0
        %363 = vmatpush1.bf16.msra.mxu0 0
        %364 = vmatprep.subr.bf16.mxu0 0
        %365 = vmatpush1.bf16.msra.mxu0 0
        %366 = vmatprep.subr.bf16.mxu0 0
        %367 = vmatpush1.bf16.msra.mxu0 %v350
        %368 = vmatprep.subr.bf16.mxu0 0
        %369 = vmatpush2.bf16.msra.mxu0 0
        %370 = vmatprep.subr.bf16.mxu0 0
        %371 = vmatpush2.bf16.msra.mxu0 0
        %372 = vmatprep.subr.bf16.mxu0 0
        %373 = vmatpush2.bf16.msra.mxu0 0
        %374 = vmatprep.subr.bf16.mxu0 0
        %375 = vmatpush2.bf16.msra.mxu0 0
        %376 = vmatprep.subr.bf16.mxu0 0
        %377 = vmatpush2.bf16.msra.mxu0 0
        %378 = vmatprep.subr.bf16.mxu0 0
        %379 = vmatpush2.bf16.msra.mxu0 0
        %380 = vmatprep.subr.bf16.mxu0 0
        %381 = vmatpush2.bf16.msra.mxu0 0
        %382 = vmatprep.subr.bf16.mxu0 0
        %383 = vmatpush2.bf16.msra.mxu0 0
        %384 = vmatprep.mubr.bf16.mxu0 0
        %385 = vmatmul.mubr.bf16.gmra.mxu0 %v346
        %v386 = vpop.f32.mrf.mxu0
        %v387 = vadd.f32 0.0, %v386
        %v388 = vpop.f32.mrf.mxu0
        %v389 = vpop.f32.mrf.mxu0
        %v390 = vpop.f32.mrf.mxu0
        %391 = vdwg.mxu0
        %v392 = vrcp.pop %v341
        %v393 = vmul.f32 %v387, %v392
        %394 = vst.msk [vmem:[%s161] sm:$0xff] %vm286, %v393
        %396 = vrot.lane.b32.xlu0 %v281, 120
        %v397 = vpop.permute.xlu0 %396
        %398 = vrot.lane.b32.xlu0 %v282, 88
        %v399 = vpop.permute.xlu0 %398
        %v401 = vsel %vm286, %v397, 0
        %v404 = vsel %vm286, %v399, 0
        %406 = vmatprep.subr.bf16.mxu0 0
        %407 = vmatpush1.bf16.xpose.msra.mxu0 0
        %408 = vmatprep.subr.bf16.mxu0 0
        %409 = vmatpush1.bf16.xpose.msra.mxu0 0
        %410 = vmatprep.subr.bf16.mxu0 0
        %411 = vmatpush1.bf16.xpose.msra.mxu0 0
        %412 = vmatprep.subr.bf16.mxu0 0
        %413 = vmatpush1.bf16.xpose.msra.mxu0 0
        %414 = vmatprep.subr.bf16.mxu0 0
        %415 = vmatpush1.bf16.xpose.msra.mxu0 0
        %416 = vmatprep.subr.bf16.mxu0 0
        %417 = vmatpush1.bf16.xpose.msra.mxu0 0
        %418 = vmatprep.subr.bf16.mxu0 0
        %419 = vmatpush1.bf16.xpose.msra.mxu0 0
        %420 = vmatprep.subr.bf16.mxu0 0
        %421 = vmatpush1.bf16.xpose.msra.mxu0 %v404
        %422 = vmatprep.subr.bf16.mxu0 0
        %423 = vmatpush2.bf16.xpose.msra.mxu0 0
        %424 = vmatprep.subr.bf16.mxu0 0
        %425 = vmatpush2.bf16.xpose.msra.mxu0 0
        %426 = vmatprep.subr.bf16.mxu0 0
        %427 = vmatpush2.bf16.xpose.msra.mxu0 0
        %428 = vmatprep.subr.bf16.mxu0 0
        %429 = vmatpush2.bf16.xpose.msra.mxu0 0
        %430 = vmatprep.subr.bf16.mxu0 0
        %431 = vmatpush2.bf16.xpose.msra.mxu0 0
        %432 = vmatprep.subr.bf16.mxu0 0
        %433 = vmatpush2.bf16.xpose.msra.mxu0 0
        %434 = vmatprep.subr.bf16.mxu0 0
        %435 = vmatpush2.bf16.xpose.msra.mxu0 0
        %436 = vmatprep.subr.bf16.mxu0 0
        %437 = vmatpush2.bf16.xpose.msra.mxu0 0
        %438 = vmatprep.mubr.bf16.mxu0 0
        %439 = vmatmul.mubr.bf16.gmra.mxu0 %v401
        %v440 = vpop.f32.mrf.mxu0
        %v441 = vadd.f32 0.0, %v440
        %v442 = vpop.f32.mrf.mxu0
        %v443 = vpop.f32.mrf.mxu0
        %v444 = vpop.f32.mrf.mxu0
        %445 = vdwg.mxu0
        %v446 = vsel %vm286, %v441, -inf
        %447 = vmax.xlane.f32.xlu0 %v446
        %v448 = vpop.xlane.xlu0 %447
        %v449 = vsub.f32 %v441, %v448
        %v450 = vmul.f32 %v449, 1.442695
        %v451 = vpow.pop %v450
        %v452 = vsel %vm286, %v451, 0.0
        %453 = vadd.xlane.f32.xlu0 %v452
        %v454 = vpop.xlane.xlu0 %453
        %v455 = vpack.c.bf16 %v451, %v451
        %456 = vrot.lane.b32.xlu0 %v282, 56
        %v457 = vpop.permute.xlu0 %456
        %v459 = vsel %vm286, %v455, 0
        %v462 = vsel %vm348, %v457, 0
        %464 = vmatprep.subr.bf16.mxu0 0
        %465 = vmatpush1.bf16.msra.mxu0 0
        %466 = vmatprep.subr.bf16.mxu0 0
        %467 = vmatpush1.bf16.msra.mxu0 0
        %468 = vmatprep.subr.bf16.mxu0 0
        %469 = vmatpush1.bf16.msra.mxu0 0
        %470 = vmatprep.subr.bf16.mxu0 0
        %471 = vmatpush1.bf16.msra.mxu0 0
        %472 = vmatprep.subr.bf16.mxu0 0
        %473 = vmatpush1.bf16.msra.mxu0 0
        %474 = vmatprep.subr.bf16.mxu0 0
        %475 = vmatpush1.bf16.msra.mxu0 0
        %476 = vmatprep.subr.bf16.mxu0 0
        %477 = vmatpush1.bf16.msra.mxu0 0
        %478 = vmatprep.subr.bf16.mxu0 0
        %479 = vmatpush1.bf16.msra.mxu0 %v462
        %480 = vmatprep.subr.bf16.mxu0 0
        %481 = vmatpush2.bf16.msra.mxu0 0
        %482 = vmatprep.subr.bf16.mxu0 0
        %483 = vmatpush2.bf16.msra.mxu0 0
        %484 = vmatprep.subr.bf16.mxu0 0
        %485 = vmatpush2.bf16.msra.mxu0 0
        %486 = vmatprep.subr.bf16.mxu0 0
        %487 = vmatpush2.bf16.msra.mxu0 0
        %488 = vmatprep.subr.bf16.mxu0 0
        %489 = vmatpush2.bf16.msra.mxu0 0
        %490 = vmatprep.subr.bf16.mxu0 0
        %491 = vmatpush2.bf16.msra.mxu0 0
        %492 = vmatprep.subr.bf16.mxu0 0
        %493 = vmatpush2.bf16.msra.mxu0 0
        %494 = vmatprep.subr.bf16.mxu0 0
        %495 = vmatpush2.bf16.msra.mxu0 0
        %496 = vmatprep.mubr.bf16.mxu0 0
        %497 = vmatmul.mubr.bf16.gmra.mxu0 %v459
        %v498 = vpop.f32.mrf.mxu0
        %v499 = vadd.f32 0.0, %v498
        %v500 = vpop.f32.mrf.mxu0
        %v501 = vpop.f32.mrf.mxu0
        %v502 = vpop.f32.mrf.mxu0
        %503 = vdwg.mxu0
        %v504 = vrcp.pop %v454
        %v505 = vmul.f32 %v499, %v504
        %507 = vrot.lane.b32.xlu0 %v505, 8
        %v508 = vpop.permute.xlu0 %507
        %vm510 = vcmask 130112
        %511 = vst.msk [vmem:[%s161] sm:$0xff] %vm510, %v508
        %512 = vrot.lane.b32.xlu0 %v281, 112
        %v513 = vpop.permute.xlu0 %512
        %514 = vrot.lane.b32.xlu0 %v282, 80
        %v515 = vpop.permute.xlu0 %514
        %v517 = vsel %vm286, %v513, 0
        %v520 = vsel %vm286, %v515, 0
        %522 = vmatprep.subr.bf16.mxu0 0
        %523 = vmatpush1.bf16.xpose.msra.mxu0 0
        %524 = vmatprep.subr.bf16.mxu0 0
        %525 = vmatpush1.bf16.xpose.msra.mxu0 0
        %526 = vmatprep.subr.bf16.mxu0 0
        %527 = vmatpush1.bf16.xpose.msra.mxu0 0
        %528 = vmatprep.subr.bf16.mxu0 0
        %529 = vmatpush1.bf16.xpose.msra.mxu0 0
        %530 = vmatprep.subr.bf16.mxu0 0
        %531 = vmatpush1.bf16.xpose.msra.mxu0 0
        %532 = vmatprep.subr.bf16.mxu0 0
        %533 = vmatpush1.bf16.xpose.msra.mxu0 0
        %534 = vmatprep.subr.bf16.mxu0 0
        %535 = vmatpush1.bf16.xpose.msra.mxu0 0
        %536 = vmatprep.subr.bf16.mxu0 0
        %537 = vmatpush1.bf16.xpose.msra.mxu0 %v520
        %538 = vmatprep.subr.bf16.mxu0 0
        %539 = vmatpush2.bf16.xpose.msra.mxu0 0
        %540 = vmatprep.subr.bf16.mxu0 0
        %541 = vmatpush2.bf16.xpose.msra.mxu0 0
        %542 = vmatprep.subr.bf16.mxu0 0
        %543 = vmatpush2.bf16.xpose.msra.mxu0 0
        %544 = vmatprep.subr.bf16.mxu0 0
        %545 = vmatpush2.bf16.xpose.msra.mxu0 0
        %546 = vmatprep.subr.bf16.mxu0 0
        %547 = vmatpush2.bf16.xpose.msra.mxu0 0
        %548 = vmatprep.subr.bf16.mxu0 0
        %549 = vmatpush2.bf16.xpose.msra.mxu0 0
        %550 = vmatprep.subr.bf16.mxu0 0
        %551 = vmatpush2.bf16.xpose.msra.mxu0 0
        %552 = vmatprep.subr.bf16.mxu0 0
        %553 = vmatpush2.bf16.xpose.msra.mxu0 0
        %554 = vmatprep.mubr.bf16.mxu0 0
        %555 = vmatmul.mubr.bf16.gmra.mxu0 %v517
        %v556 = vpop.f32.mrf.mxu0
        %v557 = vadd.f32 0.0, %v556
        %v558 = vpop.f32.mrf.mxu0
        %v559 = vpop.f32.mrf.mxu0
        %v560 = vpop.f32.mrf.mxu0
        %561 = vdwg.mxu0
        %v562 = vsel %vm286, %v557, -inf
        %563 = vmax.xlane.f32.xlu0 %v562
        %v564 = vpop.xlane.xlu0 %563
        %v565 = vsub.f32 %v557, %v564
        %v566 = vmul.f32 %v565, 1.442695
        %v567 = vpow.pop %v566
        %v568 = vsel %vm286, %v567, 0.0
        %569 = vadd.xlane.f32.xlu0 %v568
        %v570 = vpop.xlane.xlu0 %569
        %v571 = vpack.c.bf16 %v567, %v567
        %572 = vrot.lane.b32.xlu0 %v282, 48
        %v573 = vpop.permute.xlu0 %572
        %v575 = vsel %vm286, %v571, 0
        %v578 = vsel %vm348, %v573, 0
        %580 = vmatprep.subr.bf16.mxu0 0
        %581 = vmatpush1.bf16.msra.mxu0 0
        %582 = vmatprep.subr.bf16.mxu0 0
        %583 = vmatpush1.bf16.msra.mxu0 0
        %584 = vmatprep.subr.bf16.mxu0 0
        %585 = vmatpush1.bf16.msra.mxu0 0
        %586 = vmatprep.subr.bf16.mxu0 0
        %587 = vmatpush1.bf16.msra.mxu0 0
        %588 = vmatprep.subr.bf16.mxu0 0
        %589 = vmatpush1.bf16.msra.mxu0 0
        %590 = vmatprep.subr.bf16.mxu0 0
        %591 = vmatpush1.bf16.msra.mxu0 0
        %592 = vmatprep.subr.bf16.mxu0 0
        %593 = vmatpush1.bf16.msra.mxu0 0
        %594 = vmatprep.subr.bf16.mxu0 0
        %595 = vmatpush1.bf16.msra.mxu0 %v578
        %596 = vmatprep.subr.bf16.mxu0 0
        %597 = vmatpush2.bf16.msra.mxu0 0
        %598 = vmatprep.subr.bf16.mxu0 0
        %599 = vmatpush2.bf16.msra.mxu0 0
        %600 = vmatprep.subr.bf16.mxu0 0
        %601 = vmatpush2.bf16.msra.mxu0 0
        %602 = vmatprep.subr.bf16.mxu0 0
        %603 = vmatpush2.bf16.msra.mxu0 0
        %604 = vmatprep.subr.bf16.mxu0 0
        %605 = vmatpush2.bf16.msra.mxu0 0
        %606 = vmatprep.subr.bf16.mxu0 0
        %607 = vmatpush2.bf16.msra.mxu0 0
        %608 = vmatprep.subr.bf16.mxu0 0
        %609 = vmatpush2.bf16.msra.mxu0 0
        %610 = vmatprep.subr.bf16.mxu0 0
        %611 = vmatpush2.bf16.msra.mxu0 0
        %612 = vmatprep.mubr.bf16.mxu0 0
        %613 = vmatmul.mubr.bf16.gmra.mxu0 %v575
        %v614 = vpop.f32.mrf.mxu0
        %v615 = vadd.f32 0.0, %v614
        %v616 = vpop.f32.mrf.mxu0
        %v617 = vpop.f32.mrf.mxu0
        %v618 = vpop.f32.mrf.mxu0
        %619 = vdwg.mxu0
        %v620 = vrcp.pop %v570
        %v621 = vmul.f32 %v615, %v620
        %623 = vrot.lane.b32.xlu0 %v621, 16
        %v624 = vpop.permute.xlu0 %623
        %vm626 = vcmask 195712
        %627 = vst.msk [vmem:[%s161] sm:$0xff] %vm626, %v624
        %628 = vrot.lane.b32.xlu0 %v281, 104
        %v629 = vpop.permute.xlu0 %628
        %630 = vrot.lane.b32.xlu0 %v282, 72
        %v631 = vpop.permute.xlu0 %630
        %v633 = vsel %vm286, %v629, 0
        %v636 = vsel %vm286, %v631, 0
        %638 = vmatprep.subr.bf16.mxu0 0
        %639 = vmatpush1.bf16.xpose.msra.mxu0 0
        %640 = vmatprep.subr.bf16.mxu0 0
        %641 = vmatpush1.bf16.xpose.msra.mxu0 0
        %642 = vmatprep.subr.bf16.mxu0 0
        %643 = vmatpush1.bf16.xpose.msra.mxu0 0
        %644 = vmatprep.subr.bf16.mxu0 0
        %645 = vmatpush1.bf16.xpose.msra.mxu0 0
        %646 = vmatprep.subr.bf16.mxu0 0
        %647 = vmatpush1.bf16.xpose.msra.mxu0 0
        %648 = vmatprep.subr.bf16.mxu0 0
        %649 = vmatpush1.bf16.xpose.msra.mxu0 0
        %650 = vmatprep.subr.bf16.mxu0 0
        %651 = vmatpush1.bf16.xpose.msra.mxu0 0
        %652 = vmatprep.subr.bf16.mxu0 0
        %653 = vmatpush1.bf16.xpose.msra.mxu0 %v636
        %654 = vmatprep.subr.bf16.mxu0 0
        %655 = vmatpush2.bf16.xpose.msra.mxu0 0
        %656 = vmatprep.subr.bf16.mxu0 0
        %657 = vmatpush2.bf16.xpose.msra.mxu0 0
        %658 = vmatprep.subr.bf16.mxu0 0
        %659 = vmatpush2.bf16.xpose.msra.mxu0 0
        %660 = vmatprep.subr.bf16.mxu0 0
        %661 = vmatpush2.bf16.xpose.msra.mxu0 0
        %662 = vmatprep.subr.bf16.mxu0 0
        %663 = vmatpush2.bf16.xpose.msra.mxu0 0
        %664 = vmatprep.subr.bf16.mxu0 0
        %665 = vmatpush2.bf16.xpose.msra.mxu0 0
        %666 = vmatprep.subr.bf16.mxu0 0
        %667 = vmatpush2.bf16.xpose.msra.mxu0 0
        %668 = vmatprep.subr.bf16.mxu0 0
        %669 = vmatpush2.bf16.xpose.msra.mxu0 0
        %670 = vmatprep.mubr.bf16.mxu0 0
        %671 = vmatmul.mubr.bf16.gmra.mxu0 %v633
        %v672 = vpop.f32.mrf.mxu0
        %v673 = vadd.f32 0.0, %v672
        %v674 = vpop.f32.mrf.mxu0
        %v675 = vpop.f32.mrf.mxu0
        %v676 = vpop.f32.mrf.mxu0
        %677 = vdwg.mxu0
        %v678 = vsel %vm286, %v673, -inf
        %679 = vmax.xlane.f32.xlu0 %v678
        %v680 = vpop.xlane.xlu0 %679
        %v681 = vsub.f32 %v673, %v680
        %v682 = vmul.f32 %v681, 1.442695
        %v683 = vpow.pop %v682
        %v684 = vsel %vm286, %v683, 0.0
        %685 = vadd.xlane.f32.xlu0 %v684
        %v686 = vpop.xlane.xlu0 %685
        %v687 = vpack.c.bf16 %v683, %v683
        %688 = vrot.lane.b32.xlu0 %v282, 40
        %v689 = vpop.permute.xlu0 %688
        %v691 = vsel %vm286, %v687, 0
        %v694 = vsel %vm348, %v689, 0
        %696 = vmatprep.subr.bf16.mxu0 0
        %697 = vmatpush1.bf16.msra.mxu0 0
        %698 = vmatprep.subr.bf16.mxu0 0
        %699 = vmatpush1.bf16.msra.mxu0 0
        %700 = vmatprep.subr.bf16.mxu0 0
        %701 = vmatpush1.bf16.msra.mxu0 0
        %702 = vmatprep.subr.bf16.mxu0 0
        %703 = vmatpush1.bf16.msra.mxu0 0
        %704 = vmatprep.subr.bf16.mxu0 0
        %705 = vmatpush1.bf16.msra.mxu0 0
        %706 = vmatprep.subr.bf16.mxu0 0
        %707 = vmatpush1.bf16.msra.mxu0 0
        %708 = vmatprep.subr.bf16.mxu0 0
        %709 = vmatpush1.bf16.msra.mxu0 0
        %710 = vmatprep.subr.bf16.mxu0 0
        %711 = vmatpush1.bf16.msra.mxu0 %v694
        %712 = vmatprep.subr.bf16.mxu0 0
        %713 = vmatpush2.bf16.msra.mxu0 0
        %714 = vmatprep.subr.bf16.mxu0 0
        %715 = vmatpush2.bf16.msra.mxu0 0
        %716 = vmatprep.subr.bf16.mxu0 0
        %717 = vmatpush2.bf16.msra.mxu0 0
        %718 = vmatprep.subr.bf16.mxu0 0
        %719 = vmatpush2.bf16.msra.mxu0 0
        %720 = vmatprep.subr.bf16.mxu0 0
        %721 = vmatpush2.bf16.msra.mxu0 0
        %722 = vmatprep.subr.bf16.mxu0 0
        %723 = vmatpush2.bf16.msra.mxu0 0
        %724 = vmatprep.subr.bf16.mxu0 0
        %725 = vmatpush2.bf16.msra.mxu0 0
        %726 = vmatprep.subr.bf16.mxu0 0
        %727 = vmatpush2.bf16.msra.mxu0 0
        %728 = vmatprep.mubr.bf16.mxu0 0
        %729 = vmatmul.mubr.bf16.gmra.mxu0 %v691
        %v730 = vpop.f32.mrf.mxu0
        %v731 = vadd.f32 0.0, %v730
        %v732 = vpop.f32.mrf.mxu0
        %v733 = vpop.f32.mrf.mxu0
        %v734 = vpop.f32.mrf.mxu0
        %735 = vdwg.mxu0
        %v736 = vrcp.pop %v686
        %v737 = vmul.f32 %v731, %v736
        %739 = vrot.lane.b32.xlu0 %v737, 24
        %v740 = vpop.permute.xlu0 %739
        %vm742 = vcmask 261312
        %743 = vst.msk [vmem:[%s161] sm:$0xff] %vm742, %v740
        %s744 = sand.u32 %s93, 1
        %s745 = scalar_lea.sflag [#allocation3], %s744
        %s746 = sand.u32 %s93, 1
        %s747 = smul.addr %s746, 8
        %s748 = scalar_lea.vmem [#allocation2], %s747
        // Predicated region
        $region33: #{tpu_custom_call.1} parent=31 // pred_check
          %p749 = pneg %p103
        $region34: #{tpu_custom_call.1} parent=31 // pred_check_branch
          %751 = sbr.rel (%p749) target = $region36
        $region35: #{tpu_custom_call.1} parent=31 // pred_region
          %s753 = ssub.s32 128, 128
          %754 = vsyncadd %s745, %s753
          %s755 = smul.addr %s17, 128
          %s756 = scalar_lea.hbm %s3, %s755
          %s758 = sshll.u32 %s748, 4
          %s759 = int_to_ptr.vmem [resolvable:$true] %s758
          %761 = dma.vmem_to_hbm [thread:$0]  %s759, 128, %s756, %s745
        $region36: #{tpu_custom_call.1} parent=31 // pred_fallthru
          _
      $region32: #{tpu_custom_call.1} parent=5 // pred_fallthru
        _
      %p762 = scmp.le.s32.totalorder 2, %s12
      // Predicated region
      $region37: #{tpu_custom_call.1} parent=5 // pred_check
        %p763 = pneg %p762
      $region38: #{tpu_custom_call.1} parent=5 // pred_check_branch
        %765 = sbr.rel (%p763) target = $region40
      $region39: #{tpu_custom_call.1} parent=5 // pred_region
        %s766 = ssub.s32 %s12, 2
        // Predicated region
        $region41: #{tpu_custom_call.1} parent=39 // pred_check
          %p767 = pneg %p109
        $region42: #{tpu_custom_call.1} parent=39 // pred_check_branch
          %769 = sbr.rel (%p767) target = $region44
        $region43: #{tpu_custom_call.1} parent=39 // pred_region
          %s770 = sand.u32 %s94, 1
          %s771 = scalar_lea.sflag [#allocation3], %s770
          %s772 = sand.u32 %s94, 1
          %s773 = smul.addr %s772, 8
          %s774 = scalar_lea.vmem [#allocation2], %s773
          %775 = dma.done %s771, 128
        $region44: #{tpu_custom_call.1} parent=39 // pred_fallthru
          _
      $region40: #{tpu_custom_call.1} parent=5 // pred_fallthru
        _
    $region6: #{tpu_custom_call.1} parent=1 // loop_footer
      %s16 = sadd.s32 1, %s12
    $region7: #{tpu_custom_call.1} parent=1 // loop_footer_branch
      %11 = sbr.rel target = $region3
    $region8: #{tpu_custom_call.1} parent=1 // loop_exit
      _
    %776 = vsyncpa [#allocation3], 1
    %s777 = scalar_lea.sflag [#allocation3], 1
    %778 = vsyncpa %s777, 1

</llo_original>
